<compile_context>
chip_gen: v7x
topology: tpu7x:2x2x1
jax: 0.10.0
libtpu: 0.0.40
codegen_flags: <defaults>
</compile_context>

<pallas_src>
import jax
import jax.numpy as jnp
from jax.experimental import pallas as pl
from jax.experimental.pallas import tpu as pltpu

_LANES = 128


def _split_cat_kernel(x_rows_ref, x_cols_ref, flat_ref, splits_ref, pad_ref):
    """Single-invocation kernel producing both forward outputs.

    x_rows_ref : (total//128, 128)  lane-dense flat view of x
    x_cols_ref : (N, W)             view of x with the split axis (W) minor
    flat_ref   : (total//128, 128)  -> reshaped to (B, C*H*W) by the wrapper
    splits_ref : (W, N)             stacked split slab, lane-dense (N % 128 == 0)
    pad_ref    : (N, 128)           VMEM staging buffer for an aligned transpose
    """
    # (1) concatenated.reshape(B, -1): split([1,1,1], -1) followed by cat(-1)
    #     is the identity permutation, so this is a straight lane-dense,
    #     unmasked full-block copy of the flattened input.
    flat_ref[...] = x_rows_ref[...]

    # (2) stacked splits (W, N): a sublane<->lane relayout of the (N, W) view.
    #     Stage into a zeroed (N, 128) buffer so the transpose operands are
    #     (8,128)-aligned, transpose on the XLU, keep the first W rows.
    w = x_cols_ref.shape[1]
    pad_ref[...] = jnp.zeros_like(pad_ref)
    pad_ref[:, 0:w] = x_cols_ref[...]
    x_t = jnp.transpose(pad_ref[...])          # (128, N), fully aligned transpose
    splits_ref[...] = x_t[0:w, :]              # (W, N)


def split_cat_forward_pallas(x):
    """Pallas implementation of Model.forward for x of shape (B, C, H, 3)."""
    B, C, H, W = x.shape
    assert W == 3, "torch.split(x, [1, 1, 1], dim=-1) requires last dim == 3"
    N = B * C * H                       # 640 = 5 * 128 -> lane-dense split slab
    total = B * C * H * W               # 1920 = 15 * 128 -> lane-dense flat slab
    assert total % _LANES == 0 and N % _LANES == 0

    # Free, contiguous reshapes (bitcasts) of the same buffer; no data movement.
    x_rows = x.reshape(total // _LANES, _LANES)   # (15, 128)
    x_cols = x.reshape(N, W)                      # (640, 3)

    flat_slab, split_slab = pl.pallas_call(
        _split_cat_kernel,
        out_shape=(
            jax.ShapeDtypeStruct((total // _LANES, _LANES), x.dtype),
            jax.ShapeDtypeStruct((W, N), x.dtype),
        ),
        in_specs=[
            pl.BlockSpec(memory_space=pltpu.MemorySpace.VMEM),
            pl.BlockSpec(memory_space=pltpu.MemorySpace.VMEM),
        ],
        out_specs=(
            pl.BlockSpec(memory_space=pltpu.MemorySpace.VMEM),
            pl.BlockSpec(memory_space=pltpu.MemorySpace.VMEM),
        ),
        scratch_shapes=[pltpu.VMEM((N, _LANES), x.dtype)],
        # Pure data movement: tell XLA's scheduler this call is cheap.
        cost_estimate=pl.CostEstimate(
            flops=0,
            transcendentals=0,
            bytes_accessed=2 * 2 * total * x.dtype.itemsize,
        ),
    )(x_rows, x_cols)

    flattened = flat_slab.reshape(B, C * H * W)
    splits = tuple(split_slab[w].reshape(B, C, H, 1) for w in range(W))
    return flattened, splits


@jax.jit
def model_forward(x):
    return split_cat_forward_pallas(x)


if __name__ == "__main__":
    key = jax.random.PRNGKey(0)
    # Last dim must be 3 for split([1,1,1], dim=-1); the original (2,32,10,10)
    # shape is a torch runtime error (the source file lives under jit_fail/).
    x = jax.random.normal(key, (2, 32, 10, 3), jnp.float32)

    flattened, splits = model_forward(x)
    flattened = jax.block_until_ready(flattened)
    splits = jax.tree_util.tree_map(jax.block_until_ready, splits)

    # Pure-JAX reference for the torch semantics.
    ref_splits = (x[..., 0:1], x[..., 1:2], x[..., 2:3])
    ref_flat = jnp.concatenate(ref_splits, axis=-1).reshape(x.shape[0], -1)

    assert flattened.shape == (2, 32 * 10 * 3)
    assert bool(jnp.array_equal(flattened, ref_flat))
    assert all(s.shape == (2, 32, 10, 1) for s in splits)
    assert all(bool(jnp.array_equal(s, r)) for s, r in zip(splits, ref_splits))

    print("KERNEL_OK")
</pallas_src>

<mosaic_0001>
module attributes {stable_mosaic.version = 11 : i64} {
  func.func @_split_cat_kernel(%arg0: memref<15x128xf32, #tpu.memory_space<vmem>>, %arg1: memref<640x3xf32, #tpu.memory_space<vmem>>, %arg2: memref<15x128xf32, #tpu.memory_space<vmem>>, %arg3: memref<3x640xf32, #tpu.memory_space<vmem>>, %arg4: memref<640x128xf32, #tpu.memory_space<vmem>>) attributes {dimension_semantics = [], scalar_prefetch = 0 : i64, scratch_operands = 1 : i64, tpu.core_type = #tpu.core_type<tc>} {
    %c0 = arith.constant 0 : index
    %c0_0 = arith.constant 0 : index
    %0 = vector.load %arg0[%c0, %c0_0] : memref<15x128xf32, #tpu.memory_space<vmem>>, vector<15x128xf32>
    %c0_1 = arith.constant 0 : index
    %c0_2 = arith.constant 0 : index
    %1 = vector.load %arg2[%c0_1, %c0_2] : memref<15x128xf32, #tpu.memory_space<vmem>>, vector<15x128xf32>
    tpu.vector_store %arg2[%c0_1, %c0_2], %0 {strides = array<i32>} : memref<15x128xf32, #tpu.memory_space<vmem>>, vector<15x128xf32>,
    %cst = arith.constant 0.000000e+00 : f32
    %2 = vector.broadcast %cst : f32 to vector<640x128xf32>
    %c0_3 = arith.constant 0 : index
    %c0_4 = arith.constant 0 : index
    %3 = vector.load %arg4[%c0_3, %c0_4] : memref<640x128xf32, #tpu.memory_space<vmem>>, vector<640x128xf32>
    tpu.vector_store %arg4[%c0_3, %c0_4], %2 {strides = array<i32>} : memref<640x128xf32, #tpu.memory_space<vmem>>, vector<640x128xf32>,
    %c0_5 = arith.constant 0 : index
    %c0_6 = arith.constant 0 : index
    %4 = vector.load %arg1[%c0_5, %c0_6] : memref<640x3xf32, #tpu.memory_space<vmem>>, vector<640x3xf32>
    %c0_7 = arith.constant 0 : index
    %c0_8 = arith.constant 0 : index
    %5 = vector.load %arg4[%c0_7, %c0_8] : memref<640x128xf32, #tpu.memory_space<vmem>>, vector<640x3xf32>
    tpu.vector_store %arg4[%c0_7, %c0_8], %4 {strides = array<i32>} : memref<640x128xf32, #tpu.memory_space<vmem>>, vector<640x3xf32>,
    %c0_9 = arith.constant 0 : index
    %c0_10 = arith.constant 0 : index
    %6 = vector.load %arg4[%c0_9, %c0_10] : memref<640x128xf32, #tpu.memory_space<vmem>>, vector<640x128xf32>
    %7 = tpu.transpose %6, [1, 0] : vector<640x128xf32> -> vector<128x640xf32>
    %8 = vector.extract_strided_slice %7 {offsets = [0, 0], sizes = [3, 640], strides = [1, 1]} : vector<128x640xf32> to vector<3x640xf32>
    %c0_11 = arith.constant 0 : index
    %c0_12 = arith.constant 0 : index
    %9 = vector.load %arg3[%c0_11, %c0_12] : memref<3x640xf32, #tpu.memory_space<vmem>>, vector<3x640xf32>
    tpu.vector_store %arg3[%c0_11, %c0_12], %8 {strides = array<i32>} : memref<3x640xf32, #tpu.memory_space<vmem>>, vector<3x640xf32>,
    return
  }
}

</mosaic_0001>

<llo_original>
// kernel: squeeze.5
$region0: #{squeeze.5}
  %s0 = inlined_call_operand.vmem [shape: f32[640], index: 0, kind: input, shape index: {}]
  %s1 = inlined_call_operand.vmem [shape: f32[2,32,10,1], index: 1, kind: output, shape index: {}]
  %v2 = vld [vmem:[%s0] sm:$0x1]
  %vm3 = vcmask 80896
  %4 = vst.msk [vmem:[%s1] sm:$0x1] %vm3, %v2
  %s5 = scalar_lea.vmem %s0, 1
  %v6 = vld [vmem:[%s5] sm:$0x1]
  %7 = vrot.lane.b32.xlu0 %v6, 126
  %v8 = vpop.permute.xlu0 %7
  %vm9 = vcmask 80896
  %s10 = scalar_lea.vmem %s1, 13
  %11 = vst.msk [vmem:[%s10] sm:$0x1] %vm9, %v8
  %s12 = scalar_lea.vmem %s0, 2
  %v13 = vld [vmem:[%s12] sm:$0x1]
  %14 = vrot.lane.b32.xlu0 %v13, 124
  %v15 = vpop.permute.xlu0 %14
  %vm16 = vcmask 80896
  %s17 = scalar_lea.vmem %s1, 26
  %18 = vst.msk [vmem:[%s17] sm:$0x1] %vm16, %v15
  %s19 = scalar_lea.vmem %s0, 3
  %v20 = vld [vmem:[%s19] sm:$0x1]
  %21 = vrot.lane.b32.xlu0 %v20, 122
  %v22 = vpop.permute.xlu0 %21
  %vm23 = vcmask 80896
  %s24 = scalar_lea.vmem %s1, 39
  %25 = vst.msk [vmem:[%s24] sm:$0x1] %vm23, %v22
  %s26 = scalar_lea.vmem %s0, 4
  %v27 = vld [vmem:[%s26] sm:$0x1]
  %28 = vrot.lane.b32.xlu0 %v27, 120
  %v29 = vpop.permute.xlu0 %28
  %vm30 = vcmask 80896
  %s31 = scalar_lea.vmem %s1, 52
  %32 = vst.msk [vmem:[%s31] sm:$0x1] %vm30, %v29
  %v33 = vld [vmem:[%s0] sm:$0x1]
  %34 = vrot.lane.b32.xlu0 %v33, 118
  %v35 = vpop.permute.xlu0 %34
  %vm36 = vcmask 80896
  %s37 = scalar_lea.vmem %s1, 1
  %38 = vst.msk [vmem:[%s37] sm:$0x1] %vm36, %v35
  %s39 = scalar_lea.vmem %s0, 1
  %v40 = vld [vmem:[%s39] sm:$0x1]
  %41 = vrot.lane.b32.xlu0 %v40, 116
  %v42 = vpop.permute.xlu0 %41
  %vm43 = vcmask 80896
  %s44 = scalar_lea.vmem %s1, 14
  %45 = vst.msk [vmem:[%s44] sm:$0x1] %vm43, %v42
  %s46 = scalar_lea.vmem %s0, 2
  %v47 = vld [vmem:[%s46] sm:$0x1]
  %48 = vrot.lane.b32.xlu0 %v47, 114
  %v49 = vpop.permute.xlu0 %48
  %vm50 = vcmask 80896
  %s51 = scalar_lea.vmem %s1, 27
  %52 = vst.msk [vmem:[%s51] sm:$0x1] %vm50, %v49
  %s53 = scalar_lea.vmem %s0, 3
  %v54 = vld [vmem:[%s53] sm:$0x1]
  %55 = vrot.lane.b32.xlu0 %v54, 112
  %v56 = vpop.permute.xlu0 %55
  %vm57 = vcmask 80896
  %s58 = scalar_lea.vmem %s1, 40
  %59 = vst.msk [vmem:[%s58] sm:$0x1] %vm57, %v56
  %s60 = scalar_lea.vmem %s0, 4
  %v61 = vld [vmem:[%s60] sm:$0x1]
  %62 = vrot.lane.b32.xlu0 %v61, 110
  %v63 = vpop.permute.xlu0 %62
  %vm64 = vcmask 80896
  %s65 = scalar_lea.vmem %s1, 53
  %66 = vst.msk [vmem:[%s65] sm:$0x1] %vm64, %v63
  %v67 = vld [vmem:[%s0] sm:$0x1]
  %68 = vrot.lane.b32.xlu0 %v67, 108
  %v69 = vpop.permute.xlu0 %68
  %vm70 = vcmask 80896
  %s71 = scalar_lea.vmem %s1, 2
  %72 = vst.msk [vmem:[%s71] sm:$0x1] %vm70, %v69
  %s73 = scalar_lea.vmem %s0, 1
  %v74 = vld [vmem:[%s73] sm:$0x1]
  %75 = vrot.lane.b32.xlu0 %v74, 106
  %v76 = vpop.permute.xlu0 %75
  %vm77 = vcmask 80896
  %s78 = scalar_lea.vmem %s1, 15
  %79 = vst.msk [vmem:[%s78] sm:$0x1] %vm77, %v76
  %s80 = scalar_lea.vmem %s0, 2
  %v81 = vld [vmem:[%s80] sm:$0x1]
  %82 = vrot.lane.b32.xlu0 %v81, 104
  %v83 = vpop.permute.xlu0 %82
  %vm84 = vcmask 80896
  %s85 = scalar_lea.vmem %s1, 28
  %86 = vst.msk [vmem:[%s85] sm:$0x1] %vm84, %v83
  %s87 = scalar_lea.vmem %s0, 3
  %v88 = vld [vmem:[%s87] sm:$0x1]
  %89 = vrot.lane.b32.xlu0 %v88, 102
  %v90 = vpop.permute.xlu0 %89
  %vm91 = vcmask 80896
  %s92 = scalar_lea.vmem %s1, 41
  %93 = vst.msk [vmem:[%s92] sm:$0x1] %vm91, %v90
  %s94 = scalar_lea.vmem %s0, 4
  %v95 = vld [vmem:[%s94] sm:$0x1]
  %96 = vrot.lane.b32.xlu0 %v95, 100
  %v97 = vpop.permute.xlu0 %96
  %vm98 = vcmask 80896
  %s99 = scalar_lea.vmem %s1, 54
  %100 = vst.msk [vmem:[%s99] sm:$0x1] %vm98, %v97
  %v101 = vld [vmem:[%s0] sm:$0x1]
  %102 = vrot.lane.b32.xlu0 %v101, 98
  %v103 = vpop.permute.xlu0 %102
  %vm104 = vcmask 80896
  %s105 = scalar_lea.vmem %s1, 3
  %106 = vst.msk [vmem:[%s105] sm:$0x1] %vm104, %v103
  %s107 = scalar_lea.vmem %s0, 1
  %v108 = vld [vmem:[%s107] sm:$0x1]
  %109 = vrot.lane.b32.xlu0 %v108, 96
  %v110 = vpop.permute.xlu0 %109
  %vm111 = vcmask 80896
  %s112 = scalar_lea.vmem %s1, 16
  %113 = vst.msk [vmem:[%s112] sm:$0x1] %vm111, %v110
  %s114 = scalar_lea.vmem %s0, 2
  %v115 = vld [vmem:[%s114] sm:$0x1]
  %116 = vrot.lane.b32.xlu0 %v115, 94
  %v117 = vpop.permute.xlu0 %116
  %vm118 = vcmask 80896
  %s119 = scalar_lea.vmem %s1, 29
  %120 = vst.msk [vmem:[%s119] sm:$0x1] %vm118, %v117
  %s121 = scalar_lea.vmem %s0, 3
  %v122 = vld [vmem:[%s121] sm:$0x1]
  %123 = vrot.lane.b32.xlu0 %v122, 92
  %v124 = vpop.permute.xlu0 %123
  %vm125 = vcmask 80896
  %s126 = scalar_lea.vmem %s1, 42
  %127 = vst.msk [vmem:[%s126] sm:$0x1] %vm125, %v124
  %s128 = scalar_lea.vmem %s0, 4
  %v129 = vld [vmem:[%s128] sm:$0x1]
  %130 = vrot.lane.b32.xlu0 %v129, 90
  %v131 = vpop.permute.xlu0 %130
  %vm132 = vcmask 80896
  %s133 = scalar_lea.vmem %s1, 55
  %134 = vst.msk [vmem:[%s133] sm:$0x1] %vm132, %v131
  %v135 = vld [vmem:[%s0] sm:$0x1]
  %136 = vrot.lane.b32.xlu0 %v135, 88
  %v137 = vpop.permute.xlu0 %136
  %vm138 = vcmask 80896
  %s139 = scalar_lea.vmem %s1, 4
  %140 = vst.msk [vmem:[%s139] sm:$0x1] %vm138, %v137
  %s141 = scalar_lea.vmem %s0, 1
  %v142 = vld [vmem:[%s141] sm:$0x1]
  %143 = vrot.lane.b32.xlu0 %v142, 86
  %v144 = vpop.permute.xlu0 %143
  %vm145 = vcmask 80896
  %s146 = scalar_lea.vmem %s1, 17
  %147 = vst.msk [vmem:[%s146] sm:$0x1] %vm145, %v144
  %s148 = scalar_lea.vmem %s0, 2
  %v149 = vld [vmem:[%s148] sm:$0x1]
  %150 = vrot.lane.b32.xlu0 %v149, 84
  %v151 = vpop.permute.xlu0 %150
  %vm152 = vcmask 80896
  %s153 = scalar_lea.vmem %s1, 30
  %154 = vst.msk [vmem:[%s153] sm:$0x1] %vm152, %v151
  %s155 = scalar_lea.vmem %s0, 3
  %v156 = vld [vmem:[%s155] sm:$0x1]
  %157 = vrot.lane.b32.xlu0 %v156, 82
  %v158 = vpop.permute.xlu0 %157
  %vm159 = vcmask 80896
  %s160 = scalar_lea.vmem %s1, 43
  %161 = vst.msk [vmem:[%s160] sm:$0x1] %vm159, %v158
  %s162 = scalar_lea.vmem %s0, 4
  %v163 = vld [vmem:[%s162] sm:$0x1]
  %164 = vrot.lane.b32.xlu0 %v163, 80
  %v165 = vpop.permute.xlu0 %164
  %vm166 = vcmask 80896
  %s167 = scalar_lea.vmem %s1, 56
  %168 = vst.msk [vmem:[%s167] sm:$0x1] %vm166, %v165
  %v169 = vld [vmem:[%s0] sm:$0x1]
  %170 = vrot.lane.b32.xlu0 %v169, 78
  %v171 = vpop.permute.xlu0 %170
  %vm172 = vcmask 80896
  %s173 = scalar_lea.vmem %s1, 5
  %174 = vst.msk [vmem:[%s173] sm:$0x1] %vm172, %v171
  %s175 = scalar_lea.vmem %s0, 1
  %v176 = vld [vmem:[%s175] sm:$0x1]
  %177 = vrot.lane.b32.xlu0 %v176, 76
  %v178 = vpop.permute.xlu0 %177
  %vm179 = vcmask 80896
  %s180 = scalar_lea.vmem %s1, 18
  %181 = vst.msk [vmem:[%s180] sm:$0x1] %vm179, %v178
  %s182 = scalar_lea.vmem %s0, 2
  %v183 = vld [vmem:[%s182] sm:$0x1]
  %184 = vrot.lane.b32.xlu0 %v183, 74
  %v185 = vpop.permute.xlu0 %184
  %vm186 = vcmask 80896
  %s187 = scalar_lea.vmem %s1, 31
  %188 = vst.msk [vmem:[%s187] sm:$0x1] %vm186, %v185
  %s189 = scalar_lea.vmem %s0, 3
  %v190 = vld [vmem:[%s189] sm:$0x1]
  %191 = vrot.lane.b32.xlu0 %v190, 72
  %v192 = vpop.permute.xlu0 %191
  %vm193 = vcmask 80896
  %s194 = scalar_lea.vmem %s1, 44
  %195 = vst.msk [vmem:[%s194] sm:$0x1] %vm193, %v192
  %s196 = scalar_lea.vmem %s0, 4
  %v197 = vld [vmem:[%s196] sm:$0x1]
  %198 = vrot.lane.b32.xlu0 %v197, 70
  %v199 = vpop.permute.xlu0 %198
  %vm200 = vcmask 80896
  %s201 = scalar_lea.vmem %s1, 57
  %202 = vst.msk [vmem:[%s201] sm:$0x1] %vm200, %v199
  %v203 = vld [vmem:[%s0] sm:$0x1]
  %204 = vrot.lane.b32.xlu0 %v203, 68
  %v205 = vpop.permute.xlu0 %204
  %vm206 = vcmask 80896
  %s207 = scalar_lea.vmem %s1, 6
  %208 = vst.msk [vmem:[%s207] sm:$0x1] %vm206, %v205
  %s209 = scalar_lea.vmem %s0, 1
  %v210 = vld [vmem:[%s209] sm:$0x1]
  %211 = vrot.lane.b32.xlu0 %v210, 66
  %v212 = vpop.permute.xlu0 %211
  %vm213 = vcmask 80896
  %s214 = scalar_lea.vmem %s1, 19
  %215 = vst.msk [vmem:[%s214] sm:$0x1] %vm213, %v212
  %s216 = scalar_lea.vmem %s0, 2
  %v217 = vld [vmem:[%s216] sm:$0x1]
  %218 = vrot.lane.b32.xlu0 %v217, 64
  %v219 = vpop.permute.xlu0 %218
  %vm220 = vcmask 80896
  %s221 = scalar_lea.vmem %s1, 32
  %222 = vst.msk [vmem:[%s221] sm:$0x1] %vm220, %v219
  %s223 = scalar_lea.vmem %s0, 3
  %v224 = vld [vmem:[%s223] sm:$0x1]
  %225 = vrot.lane.b32.xlu0 %v224, 62
  %v226 = vpop.permute.xlu0 %225
  %vm227 = vcmask 80896
  %s228 = scalar_lea.vmem %s1, 45
  %229 = vst.msk [vmem:[%s228] sm:$0x1] %vm227, %v226
  %s230 = scalar_lea.vmem %s0, 4
  %v231 = vld [vmem:[%s230] sm:$0x1]
  %232 = vrot.lane.b32.xlu0 %v231, 60
  %v233 = vpop.permute.xlu0 %232
  %vm234 = vcmask 80896
  %s235 = scalar_lea.vmem %s1, 58
  %236 = vst.msk [vmem:[%s235] sm:$0x1] %vm234, %v233
  %v237 = vld [vmem:[%s0] sm:$0x1]
  %238 = vrot.lane.b32.xlu0 %v237, 58
  %v239 = vpop.permute.xlu0 %238
  %vm240 = vcmask 80896
  %s241 = scalar_lea.vmem %s1, 7
  %242 = vst.msk [vmem:[%s241] sm:$0x1] %vm240, %v239
  %s243 = scalar_lea.vmem %s0, 1
  %v244 = vld [vmem:[%s243] sm:$0x1]
  %245 = vrot.lane.b32.xlu0 %v244, 56
  %v246 = vpop.permute.xlu0 %245
  %vm247 = vcmask 80896
  %s248 = scalar_lea.vmem %s1, 20
  %249 = vst.msk [vmem:[%s248] sm:$0x1] %vm247, %v246
  %s250 = scalar_lea.vmem %s0, 2
  %v251 = vld [vmem:[%s250] sm:$0x1]
  %252 = vrot.lane.b32.xlu0 %v251, 54
  %v253 = vpop.permute.xlu0 %252
  %vm254 = vcmask 80896
  %s255 = scalar_lea.vmem %s1, 33
  %256 = vst.msk [vmem:[%s255] sm:$0x1] %vm254, %v253
  %s257 = scalar_lea.vmem %s0, 3
  %v258 = vld [vmem:[%s257] sm:$0x1]
  %259 = vrot.lane.b32.xlu0 %v258, 52
  %v260 = vpop.permute.xlu0 %259
  %vm261 = vcmask 80896
  %s262 = scalar_lea.vmem %s1, 46
  %263 = vst.msk [vmem:[%s262] sm:$0x1] %vm261, %v260
  %s264 = scalar_lea.vmem %s0, 4
  %v265 = vld [vmem:[%s264] sm:$0x1]
  %266 = vrot.lane.b32.xlu0 %v265, 50
  %v267 = vpop.permute.xlu0 %266
  %vm268 = vcmask 80896
  %s269 = scalar_lea.vmem %s1, 59
  %270 = vst.msk [vmem:[%s269] sm:$0x1] %vm268, %v267
  %v271 = vld [vmem:[%s0] sm:$0x1]
  %272 = vrot.lane.b32.xlu0 %v271, 48
  %v273 = vpop.permute.xlu0 %272
  %vm274 = vcmask 80896
  %s275 = scalar_lea.vmem %s1, 8
  %276 = vst.msk [vmem:[%s275] sm:$0x1] %vm274, %v273
  %s277 = scalar_lea.vmem %s0, 1
  %v278 = vld [vmem:[%s277] sm:$0x1]
  %279 = vrot.lane.b32.xlu0 %v278, 46
  %v280 = vpop.permute.xlu0 %279
  %vm281 = vcmask 80896
  %s282 = scalar_lea.vmem %s1, 21
  %283 = vst.msk [vmem:[%s282] sm:$0x1] %vm281, %v280
  %s284 = scalar_lea.vmem %s0, 2
  %v285 = vld [vmem:[%s284] sm:$0x1]
  %286 = vrot.lane.b32.xlu0 %v285, 44
  %v287 = vpop.permute.xlu0 %286
  %vm288 = vcmask 80896
  %s289 = scalar_lea.vmem %s1, 34
  %290 = vst.msk [vmem:[%s289] sm:$0x1] %vm288, %v287
  %s291 = scalar_lea.vmem %s0, 3
  %v292 = vld [vmem:[%s291] sm:$0x1]
  %293 = vrot.lane.b32.xlu0 %v292, 42
  %v294 = vpop.permute.xlu0 %293
  %vm295 = vcmask 80896
  %s296 = scalar_lea.vmem %s1, 47
  %297 = vst.msk [vmem:[%s296] sm:$0x1] %vm295, %v294
  %s298 = scalar_lea.vmem %s0, 4
  %v299 = vld [vmem:[%s298] sm:$0x1]
  %300 = vrot.lane.b32.xlu0 %v299, 40
  %v301 = vpop.permute.xlu0 %300
  %vm302 = vcmask 80896
  %s303 = scalar_lea.vmem %s1, 60
  %304 = vst.msk [vmem:[%s303] sm:$0x1] %vm302, %v301
  %v305 = vld [vmem:[%s0] sm:$0x1]
  %306 = vrot.lane.b32.xlu0 %v305, 38
  %v307 = vpop.permute.xlu0 %306
  %vm308 = vcmask 80896
  %s309 = scalar_lea.vmem %s1, 9
  %310 = vst.msk [vmem:[%s309] sm:$0x1] %vm308, %v307
  %s311 = scalar_lea.vmem %s0, 1
  %v312 = vld [vmem:[%s311] sm:$0x1]
  %313 = vrot.lane.b32.xlu0 %v312, 36
  %v314 = vpop.permute.xlu0 %313
  %vm315 = vcmask 80896
  %s316 = scalar_lea.vmem %s1, 22
  %317 = vst.msk [vmem:[%s316] sm:$0x1] %vm315, %v314
  %s318 = scalar_lea.vmem %s0, 2
  %v319 = vld [vmem:[%s318] sm:$0x1]
  %320 = vrot.lane.b32.xlu0 %v319, 34
  %v321 = vpop.permute.xlu0 %320
  %vm322 = vcmask 80896
  %s323 = scalar_lea.vmem %s1, 35
  %324 = vst.msk [vmem:[%s323] sm:$0x1] %vm322, %v321
  %s325 = scalar_lea.vmem %s0, 3
  %v326 = vld [vmem:[%s325] sm:$0x1]
  %327 = vrot.lane.b32.xlu0 %v326, 32
  %v328 = vpop.permute.xlu0 %327
  %vm329 = vcmask 80896
  %s330 = scalar_lea.vmem %s1, 48
  %331 = vst.msk [vmem:[%s330] sm:$0x1] %vm329, %v328
  %s332 = scalar_lea.vmem %s0, 4
  %v333 = vld [vmem:[%s332] sm:$0x1]
  %334 = vrot.lane.b32.xlu0 %v333, 30
  %v335 = vpop.permute.xlu0 %334
  %vm336 = vcmask 80896
  %s337 = scalar_lea.vmem %s1, 61
  %338 = vst.msk [vmem:[%s337] sm:$0x1] %vm336, %v335
  %v339 = vld [vmem:[%s0] sm:$0x1]
  %340 = vrot.lane.b32.xlu0 %v339, 28
  %v341 = vpop.permute.xlu0 %340
  %vm342 = vcmask 80896
  %s343 = scalar_lea.vmem %s1, 10
  %344 = vst.msk [vmem:[%s343] sm:$0x1] %vm342, %v341
  %s345 = scalar_lea.vmem %s0, 1
  %v346 = vld [vmem:[%s345] sm:$0x1]
  %347 = vrot.lane.b32.xlu0 %v346, 26
  %v348 = vpop.permute.xlu0 %347
  %vm349 = vcmask 80896
  %s350 = scalar_lea.vmem %s1, 23
  %351 = vst.msk [vmem:[%s350] sm:$0x1] %vm349, %v348
  %s352 = scalar_lea.vmem %s0, 2
  %v353 = vld [vmem:[%s352] sm:$0x1]
  %354 = vrot.lane.b32.xlu0 %v353, 24
  %v355 = vpop.permute.xlu0 %354
  %vm356 = vcmask 80896
  %s357 = scalar_lea.vmem %s1, 36
  %358 = vst.msk [vmem:[%s357] sm:$0x1] %vm356, %v355
  %s359 = scalar_lea.vmem %s0, 3
  %v360 = vld [vmem:[%s359] sm:$0x1]
  %361 = vrot.lane.b32.xlu0 %v360, 22
  %v362 = vpop.permute.xlu0 %361
  %vm363 = vcmask 80896
  %s364 = scalar_lea.vmem %s1, 49
  %365 = vst.msk [vmem:[%s364] sm:$0x1] %vm363, %v362
  %s366 = scalar_lea.vmem %s0, 4
  %v367 = vld [vmem:[%s366] sm:$0x1]
  %368 = vrot.lane.b32.xlu0 %v367, 20
  %v369 = vpop.permute.xlu0 %368
  %vm370 = vcmask 80896
  %s371 = scalar_lea.vmem %s1, 62
  %372 = vst.msk [vmem:[%s371] sm:$0x1] %vm370, %v369
  %v373 = vld [vmem:[%s0] sm:$0x1]
  %374 = vrot.lane.b32.xlu0 %v373, 18
  %v375 = vpop.permute.xlu0 %374
  %vm376 = vcmask 80896
  %s377 = scalar_lea.vmem %s1, 11
  %378 = vst.msk [vmem:[%s377] sm:$0x1] %vm376, %v375
  %s379 = scalar_lea.vmem %s0, 1
  %v380 = vld [vmem:[%s379] sm:$0x1]
  %381 = vrot.lane.b32.xlu0 %v380, 16
  %v382 = vpop.permute.xlu0 %381
  %vm383 = vcmask 80896
  %s384 = scalar_lea.vmem %s1, 24
  %385 = vst.msk [vmem:[%s384] sm:$0x1] %vm383, %v382
  %s386 = scalar_lea.vmem %s0, 2
  %v387 = vld [vmem:[%s386] sm:$0x1]
  %388 = vrot.lane.b32.xlu0 %v387, 14
  %v389 = vpop.permute.xlu0 %388
  %vm390 = vcmask 80896
  %s391 = scalar_lea.vmem %s1, 37
  %392 = vst.msk [vmem:[%s391] sm:$0x1] %vm390, %v389
  %s393 = scalar_lea.vmem %s0, 3
  %v394 = vld [vmem:[%s393] sm:$0x1]
  %395 = vrot.lane.b32.xlu0 %v394, 12
  %v396 = vpop.permute.xlu0 %395
  %vm397 = vcmask 80896
  %s398 = scalar_lea.vmem %s1, 50
  %399 = vst.msk [vmem:[%s398] sm:$0x1] %vm397, %v396
  %s400 = scalar_lea.vmem %s0, 4
  %v401 = vld [vmem:[%s400] sm:$0x1]
  %402 = vrot.lane.b32.xlu0 %v401, 10
  %v403 = vpop.permute.xlu0 %402
  %vm404 = vcmask 80896
  %s405 = scalar_lea.vmem %s1, 63
  %406 = vst.msk [vmem:[%s405] sm:$0x1] %vm404, %v403
  %v407 = vld [vmem:[%s0] sm:$0x1]
  %s408 = scalar_lea.vmem %s0, 1
  %v409 = vld [vmem:[%s408] sm:$0x1]
  %vm410 = vcmask 982016
  %v411 = vsel %vm410, %v409, %v407
  %412 = vrot.lane.b32.xlu0 %v411, 8
  %v413 = vpop.permute.xlu0 %412
  %vm414 = vcmask 64512
  %s415 = scalar_lea.vmem %s1, 12
  %416 = vst.msk [vmem:[%s415] sm:$0x1] %vm414, %v413
  %vm417 = vcmask 80960
  %s418 = scalar_lea.vmem %s1, 12
  %419 = vst.msk [vmem:[%s418] sm:$0x1] %vm417, %v413
  %s420 = scalar_lea.vmem %s0, 1
  %v421 = vld [vmem:[%s420] sm:$0x1]
  %s422 = scalar_lea.vmem %s0, 2
  %v423 = vld [vmem:[%s422] sm:$0x1]
  %vm424 = vcmask 998400
  %v425 = vsel %vm424, %v423, %v421
  %426 = vrot.lane.b32.xlu0 %v425, 6
  %v427 = vpop.permute.xlu0 %426
  %vm428 = vcmask 48128
  %s429 = scalar_lea.vmem %s1, 25
  %430 = vst.msk [vmem:[%s429] sm:$0x1] %vm428, %v427
  %vm431 = vcmask 80944
  %s432 = scalar_lea.vmem %s1, 25
  %433 = vst.msk [vmem:[%s432] sm:$0x1] %vm431, %v427
  %s434 = scalar_lea.vmem %s0, 2
  %v435 = vld [vmem:[%s434] sm:$0x1]
  %s436 = scalar_lea.vmem %s0, 3
  %v437 = vld [vmem:[%s436] sm:$0x1]
  %vm438 = vcmask 1014784
  %v439 = vsel %vm438, %v437, %v435
  %440 = vrot.lane.b32.xlu0 %v439, 4
  %v441 = vpop.permute.xlu0 %440
  %vm442 = vcmask 31744
  %s443 = scalar_lea.vmem %s1, 38
  %444 = vst.msk [vmem:[%s443] sm:$0x1] %vm442, %v441
  %vm445 = vcmask 80928
  %s446 = scalar_lea.vmem %s1, 38
  %447 = vst.msk [vmem:[%s446] sm:$0x1] %vm445, %v441
  %s448 = scalar_lea.vmem %s0, 3
  %v449 = vld [vmem:[%s448] sm:$0x1]
  %s450 = scalar_lea.vmem %s0, 4
  %v451 = vld [vmem:[%s450] sm:$0x1]
  %vm452 = vcmask 1031168
  %v453 = vsel %vm452, %v451, %v449
  %454 = vrot.lane.b32.xlu0 %v453, 2
  %v455 = vpop.permute.xlu0 %454
  %vm456 = vcmask 15360
  %s457 = scalar_lea.vmem %s1, 51
  %458 = vst.msk [vmem:[%s457] sm:$0x1] %vm456, %v455
  %vm459 = vcmask 80912
  %s460 = scalar_lea.vmem %s1, 51
  %461 = vst.msk [vmem:[%s460] sm:$0x1] %vm459, %v455

// kernel: model_forward.1
$region0: #{model_forward.1}
  #allocation0 [shape = 'u32[]', space=smem, size = 0x4, offset = 0x4, fixed_abs, tag = 'smem constant byte address 0x4 - core index']
  #allocation1 [shape = 'u32[144,128]{1,0:T(1,128)}', space=vmem, size = 0x12000, scoped, tag = 'internal scratch']
  #allocation2 [shape = 'f32[640,128]{1,0:T(8,128)}', space=vmem, size = 0x50000, scoped, tag = 'scratch operand']
  %s0 = inlined_call_operand.vmem [shape: f32[15,128], index: 0, kind: input, shape index: {}]
  %s1 = inlined_call_operand.vmem [shape: f32[640,3], index: 1, kind: input, shape index: {}]
  %s2 = inlined_call_operand.vmem [shape: f32[15,128], index: 2, kind: output, shape index: {0}]
  %s3 = inlined_call_operand.vmem [shape: f32[3,640], index: 3, kind: output, shape index: {1}]
  %4 = xla_tuple %s2, %s3
  %s5 = sld [smem:[#allocation0]]
  $region26: #{model_forward.1} parent=0
    _
  %s7 = ssub.s32 1, %s5
  %s8 = scalar_select 0, %s7, %s5
  // Predicated region
  $region2: #{model_forward.1} parent=0 // pred_check
    _
  $region3: #{model_forward.1} parent=0 // pred_check_branch
    %10 = sbr.rel (0) target = $region5
  $region4: #{model_forward.1} parent=0 // pred_region
    _
  $region5: #{model_forward.1} parent=0 // pred_fallthru
    _
  // Predicated region
  $region6: #{model_forward.1} parent=0 // pred_check
    _
  $region7: #{model_forward.1} parent=0 // pred_check_branch
    %12 = sbr.rel (0) target = $region9
  $region8: #{model_forward.1} parent=0 // pred_region
    _
  $region9: #{model_forward.1} parent=0 // pred_fallthru
    _
  %v13 = vld [vmem:[%s0] sm:$0xff]
  %v14 = vld [vmem:[%s0 + $0x8] sm:$0x7f]
  %15 = vst [vmem:[%s2] sm:$0xff] %v13
  %16 = vst [vmem:[%s2 + $0x8] sm:$0x7f] %v14
  %17 = vst [vmem:[#allocation2] sm:$0xff] 0.0
  %18 = vst [vmem:[#allocation2 + $0x8] sm:$0xff] 0.0
  %19 = vst [vmem:[#allocation2 + $0x10] sm:$0xff] 0.0
  %20 = vst [vmem:[#allocation2 + $0x18] sm:$0xff] 0.0
  %21 = vst [vmem:[#allocation2 + $0x20] sm:$0xff] 0.0
  %22 = vst [vmem:[#allocation2 + $0x28] sm:$0xff] 0.0
  %23 = vst [vmem:[#allocation2 + $0x30] sm:$0xff] 0.0
  %24 = vst [vmem:[#allocation2 + $0x38] sm:$0xff] 0.0
  %25 = vst [vmem:[#allocation2 + $0x40] sm:$0xff] 0.0
  %26 = vst [vmem:[#allocation2 + $0x48] sm:$0xff] 0.0
  %27 = vst [vmem:[#allocation2 + $0x50] sm:$0xff] 0.0
  %28 = vst [vmem:[#allocation2 + $0x58] sm:$0xff] 0.0
  %29 = vst [vmem:[#allocation2 + $0x60] sm:$0xff] 0.0
  %30 = vst [vmem:[#allocation2 + $0x68] sm:$0xff] 0.0
  %31 = vst [vmem:[#allocation2 + $0x70] sm:$0xff] 0.0
  %32 = vst [vmem:[#allocation2 + $0x78] sm:$0xff] 0.0
  %33 = vst [vmem:[#allocation2 + $0x80] sm:$0xff] 0.0
  %34 = vst [vmem:[#allocation2 + $0x88] sm:$0xff] 0.0
  %35 = vst [vmem:[#allocation2 + $0x90] sm:$0xff] 0.0
  %36 = vst [vmem:[#allocation2 + $0x98] sm:$0xff] 0.0
  %37 = vst [vmem:[#allocation2 + $0xa0] sm:$0xff] 0.0
  %38 = vst [vmem:[#allocation2 + $0xa8] sm:$0xff] 0.0
  %39 = vst [vmem:[#allocation2 + $0xb0] sm:$0xff] 0.0
  %40 = vst [vmem:[#allocation2 + $0xb8] sm:$0xff] 0.0
  %41 = vst [vmem:[#allocation2 + $0xc0] sm:$0xff] 0.0
  %42 = vst [vmem:[#allocation2 + $0xc8] sm:$0xff] 0.0
  %43 = vst [vmem:[#allocation2 + $0xd0] sm:$0xff] 0.0
  %44 = vst [vmem:[#allocation2 + $0xd8] sm:$0xff] 0.0
  %45 = vst [vmem:[#allocation2 + $0xe0] sm:$0xff] 0.0
  %46 = vst [vmem:[#allocation2 + $0xe8] sm:$0xff] 0.0
  %47 = vst [vmem:[#allocation2 + $0xf0] sm:$0xff] 0.0
  %48 = vst [vmem:[#allocation2 + $0xf8] sm:$0xff] 0.0
  %49 = vst [vmem:[#allocation2 + $0x100] sm:$0xff] 0.0
  %50 = vst [vmem:[#allocation2 + $0x108] sm:$0xff] 0.0
  %51 = vst [vmem:[#allocation2 + $0x110] sm:$0xff] 0.0
  %52 = vst [vmem:[#allocation2 + $0x118] sm:$0xff] 0.0
  %53 = vst [vmem:[#allocation2 + $0x120] sm:$0xff] 0.0
  %54 = vst [vmem:[#allocation2 + $0x128] sm:$0xff] 0.0
  %55 = vst [vmem:[#allocation2 + $0x130] sm:$0xff] 0.0
  %56 = vst [vmem:[#allocation2 + $0x138] sm:$0xff] 0.0
  %57 = vst [vmem:[#allocation2 + $0x140] sm:$0xff] 0.0
  %58 = vst [vmem:[#allocation2 + $0x148] sm:$0xff] 0.0
  %59 = vst [vmem:[#allocation2 + $0x150] sm:$0xff] 0.0
  %60 = vst [vmem:[#allocation2 + $0x158] sm:$0xff] 0.0
  %61 = vst [vmem:[#allocation2 + $0x160] sm:$0xff] 0.0
  %62 = vst [vmem:[#allocation2 + $0x168] sm:$0xff] 0.0
  %63 = vst [vmem:[#allocation2 + $0x170] sm:$0xff] 0.0
  %64 = vst [vmem:[#allocation2 + $0x178] sm:$0xff] 0.0
  %65 = vst [vmem:[#allocation2 + $0x180] sm:$0xff] 0.0
  %66 = vst [vmem:[#allocation2 + $0x188] sm:$0xff] 0.0
  %67 = vst [vmem:[#allocation2 + $0x190] sm:$0xff] 0.0
  %68 = vst [vmem:[#allocation2 + $0x198] sm:$0xff] 0.0
  %69 = vst [vmem:[#allocation2 + $0x1a0] sm:$0xff] 0.0
  %70 = vst [vmem:[#allocation2 + $0x1a8] sm:$0xff] 0.0
  %71 = vst [vmem:[#allocation2 + $0x1b0] sm:$0xff] 0.0
  %72 = vst [vmem:[#allocation2 + $0x1b8] sm:$0xff] 0.0
  %73 = vst [vmem:[#allocation2 + $0x1c0] sm:$0xff] 0.0
  %74 = vst [vmem:[#allocation2 + $0x1c8] sm:$0xff] 0.0
  %75 = vst [vmem:[#allocation2 + $0x1d0] sm:$0xff] 0.0
  %76 = vst [vmem:[#allocation2 + $0x1d8] sm:$0xff] 0.0
  %77 = vst [vmem:[#allocation2 + $0x1e0] sm:$0xff] 0.0
  %78 = vst [vmem:[#allocation2 + $0x1e8] sm:$0xff] 0.0
  %79 = vst [vmem:[#allocation2 + $0x1f0] sm:$0xff] 0.0
  %80 = vst [vmem:[#allocation2 + $0x1f8] sm:$0xff] 0.0
  %81 = vst [vmem:[#allocation2 + $0x200] sm:$0xff] 0.0
  %82 = vst [vmem:[#allocation2 + $0x208] sm:$0xff] 0.0
  %83 = vst [vmem:[#allocation2 + $0x210] sm:$0xff] 0.0
  %84 = vst [vmem:[#allocation2 + $0x218] sm:$0xff] 0.0
  %85 = vst [vmem:[#allocation2 + $0x220] sm:$0xff] 0.0
  %86 = vst [vmem:[#allocation2 + $0x228] sm:$0xff] 0.0
  %87 = vst [vmem:[#allocation2 + $0x230] sm:$0xff] 0.0
  %88 = vst [vmem:[#allocation2 + $0x238] sm:$0xff] 0.0
  %89 = vst [vmem:[#allocation2 + $0x240] sm:$0xff] 0.0
  %90 = vst [vmem:[#allocation2 + $0x248] sm:$0xff] 0.0
  %91 = vst [vmem:[#allocation2 + $0x250] sm:$0xff] 0.0
  %92 = vst [vmem:[#allocation2 + $0x258] sm:$0xff] 0.0
  %93 = vst [vmem:[#allocation2 + $0x260] sm:$0xff] 0.0
  %94 = vst [vmem:[#allocation2 + $0x268] sm:$0xff] 0.0
  %95 = vst [vmem:[#allocation2 + $0x270] sm:$0xff] 0.0
  %96 = vst [vmem:[#allocation2 + $0x278] sm:$0xff] 0.0
  %v97 = vld [vmem:[%s1] sm:$0xff]
  %v98 = vld [vmem:[%s1 + $0x8] sm:$0xff]
  %v99 = vld [vmem:[%s1 + $0x10] sm:$0xff]
  %v100 = vld [vmem:[%s1 + $0x18] sm:$0xff]
  %v101 = vld [vmem:[%s1 + $0x20] sm:$0xff]
  %v102 = vld [vmem:[%s1 + $0x28] sm:$0xff]
  %v103 = vld [vmem:[%s1 + $0x30] sm:$0xff]
  %v104 = vld [vmem:[%s1 + $0x38] sm:$0xff]
  %v105 = vld [vmem:[%s1 + $0x40] sm:$0xff]
  %v106 = vld [vmem:[%s1 + $0x48] sm:$0xff]
  %v107 = vld [vmem:[%s1 + $0x50] sm:$0xff]
  %v108 = vld [vmem:[%s1 + $0x58] sm:$0xff]
  %v109 = vld [vmem:[%s1 + $0x60] sm:$0xff]
  %v110 = vld [vmem:[%s1 + $0x68] sm:$0xff]
  %v111 = vld [vmem:[%s1 + $0x70] sm:$0xff]
  %v112 = vld [vmem:[%s1 + $0x78] sm:$0xff]
  %v113 = vld [vmem:[%s1 + $0x80] sm:$0xff]
  %v114 = vld [vmem:[%s1 + $0x88] sm:$0xff]
  %v115 = vld [vmem:[%s1 + $0x90] sm:$0xff]
  %v116 = vld [vmem:[%s1 + $0x98] sm:$0xff]
  %v117 = vld [vmem:[%s1 + $0xa0] sm:$0xff]
  %v118 = vld [vmem:[%s1 + $0xa8] sm:$0xff]
  %v119 = vld [vmem:[%s1 + $0xb0] sm:$0xff]
  %v120 = vld [vmem:[%s1 + $0xb8] sm:$0xff]
  %v121 = vld [vmem:[%s1 + $0xc0] sm:$0xff]
  %v122 = vld [vmem:[%s1 + $0xc8] sm:$0xff]
  %v123 = vld [vmem:[%s1 + $0xd0] sm:$0xff]
  %v124 = vld [vmem:[%s1 + $0xd8] sm:$0xff]
  %v125 = vld [vmem:[%s1 + $0xe0] sm:$0xff]
  %v126 = vld [vmem:[%s1 + $0xe8] sm:$0xff]
  %v127 = vld [vmem:[%s1 + $0xf0] sm:$0xff]
  %v128 = vld [vmem:[%s1 + $0xf8] sm:$0xff]
  %v129 = vld [vmem:[%s1 + $0x100] sm:$0xff]
  %v130 = vld [vmem:[%s1 + $0x108] sm:$0xff]
  %v131 = vld [vmem:[%s1 + $0x110] sm:$0xff]
  %v132 = vld [vmem:[%s1 + $0x118] sm:$0xff]
  %v133 = vld [vmem:[%s1 + $0x120] sm:$0xff]
  %v134 = vld [vmem:[%s1 + $0x128] sm:$0xff]
  %v135 = vld [vmem:[%s1 + $0x130] sm:$0xff]
  %v136 = vld [vmem:[%s1 + $0x138] sm:$0xff]
  %v137 = vld [vmem:[%s1 + $0x140] sm:$0xff]
  %v138 = vld [vmem:[%s1 + $0x148] sm:$0xff]
  %v139 = vld [vmem:[%s1 + $0x150] sm:$0xff]
  %v140 = vld [vmem:[%s1 + $0x158] sm:$0xff]
  %v141 = vld [vmem:[%s1 + $0x160] sm:$0xff]
  %v142 = vld [vmem:[%s1 + $0x168] sm:$0xff]
  %v143 = vld [vmem:[%s1 + $0x170] sm:$0xff]
  %v144 = vld [vmem:[%s1 + $0x178] sm:$0xff]
  %v145 = vld [vmem:[%s1 + $0x180] sm:$0xff]
  %v146 = vld [vmem:[%s1 + $0x188] sm:$0xff]
  %v147 = vld [vmem:[%s1 + $0x190] sm:$0xff]
  %v148 = vld [vmem:[%s1 + $0x198] sm:$0xff]
  %v149 = vld [vmem:[%s1 + $0x1a0] sm:$0xff]
  %v150 = vld [vmem:[%s1 + $0x1a8] sm:$0xff]
  %v151 = vld [vmem:[%s1 + $0x1b0] sm:$0xff]
  %v152 = vld [vmem:[%s1 + $0x1b8] sm:$0xff]
  %v153 = vld [vmem:[%s1 + $0x1c0] sm:$0xff]
  %v154 = vld [vmem:[%s1 + $0x1c8] sm:$0xff]
  %v155 = vld [vmem:[%s1 + $0x1d0] sm:$0xff]
  %v156 = vld [vmem:[%s1 + $0x1d8] sm:$0xff]
  %v157 = vld [vmem:[%s1 + $0x1e0] sm:$0xff]
  %v158 = vld [vmem:[%s1 + $0x1e8] sm:$0xff]
  %v159 = vld [vmem:[%s1 + $0x1f0] sm:$0xff]
  %v160 = vld [vmem:[%s1 + $0x1f8] sm:$0xff]
  %v161 = vld [vmem:[%s1 + $0x200] sm:$0xff]
  %v162 = vld [vmem:[%s1 + $0x208] sm:$0xff]
  %v163 = vld [vmem:[%s1 + $0x210] sm:$0xff]
  %v164 = vld [vmem:[%s1 + $0x218] sm:$0xff]
  %v165 = vld [vmem:[%s1 + $0x220] sm:$0xff]
  %v166 = vld [vmem:[%s1 + $0x228] sm:$0xff]
  %v167 = vld [vmem:[%s1 + $0x230] sm:$0xff]
  %v168 = vld [vmem:[%s1 + $0x238] sm:$0xff]
  %v169 = vld [vmem:[%s1 + $0x240] sm:$0xff]
  %v170 = vld [vmem:[%s1 + $0x248] sm:$0xff]
  %v171 = vld [vmem:[%s1 + $0x250] sm:$0xff]
  %v172 = vld [vmem:[%s1 + $0x258] sm:$0xff]
  %v173 = vld [vmem:[%s1 + $0x260] sm:$0xff]
  %v174 = vld [vmem:[%s1 + $0x268] sm:$0xff]
  %v175 = vld [vmem:[%s1 + $0x270] sm:$0xff]
  %v176 = vld [vmem:[%s1 + $0x278] sm:$0xff]
  %vm177 = vcmask 23552
  %178 = vst.msk [vmem:[#allocation2] sm:$0xff] %vm177, %v97
  %179 = vst.msk [vmem:[#allocation2 + $0x8] sm:$0xff] %vm177, %v98
  %180 = vst.msk [vmem:[#allocation2 + $0x10] sm:$0xff] %vm177, %v99
  %181 = vst.msk [vmem:[#allocation2 + $0x18] sm:$0xff] %vm177, %v100
  %182 = vst.msk [vmem:[#allocation2 + $0x20] sm:$0xff] %vm177, %v101
  %183 = vst.msk [vmem:[#allocation2 + $0x28] sm:$0xff] %vm177, %v102
  %184 = vst.msk [vmem:[#allocation2 + $0x30] sm:$0xff] %vm177, %v103
  %185 = vst.msk [vmem:[#allocation2 + $0x38] sm:$0xff] %vm177, %v104
  %186 = vst.msk [vmem:[#allocation2 + $0x40] sm:$0xff] %vm177, %v105
  %187 = vst.msk [vmem:[#allocation2 + $0x48] sm:$0xff] %vm177, %v106
  %188 = vst.msk [vmem:[#allocation2 + $0x50] sm:$0xff] %vm177, %v107
  %189 = vst.msk [vmem:[#allocation2 + $0x58] sm:$0xff] %vm177, %v108
  %190 = vst.msk [vmem:[#allocation2 + $0x60] sm:$0xff] %vm177, %v109
  %191 = vst.msk [vmem:[#allocation2 + $0x68] sm:$0xff] %vm177, %v110
  %192 = vst.msk [vmem:[#allocation2 + $0x70] sm:$0xff] %vm177, %v111
  %193 = vst.msk [vmem:[#allocation2 + $0x78] sm:$0xff] %vm177, %v112
  %194 = vst.msk [vmem:[#allocation2 + $0x80] sm:$0xff] %vm177, %v113
  %195 = vst.msk [vmem:[#allocation2 + $0x88] sm:$0xff] %vm177, %v114
  %196 = vst.msk [vmem:[#allocation2 + $0x90] sm:$0xff] %vm177, %v115
  %197 = vst.msk [vmem:[#allocation2 + $0x98] sm:$0xff] %vm177, %v116
  %198 = vst.msk [vmem:[#allocation2 + $0xa0] sm:$0xff] %vm177, %v117
  %199 = vst.msk [vmem:[#allocation2 + $0xa8] sm:$0xff] %vm177, %v118
  %200 = vst.msk [vmem:[#allocation2 + $0xb0] sm:$0xff] %vm177, %v119
  %201 = vst.msk [vmem:[#allocation2 + $0xb8] sm:$0xff] %vm177, %v120
  %202 = vst.msk [vmem:[#allocation2 + $0xc0] sm:$0xff] %vm177, %v121
  %203 = vst.msk [vmem:[#allocation2 + $0xc8] sm:$0xff] %vm177, %v122
  %204 = vst.msk [vmem:[#allocation2 + $0xd0] sm:$0xff] %vm177, %v123
  %205 = vst.msk [vmem:[#allocation2 + $0xd8] sm:$0xff] %vm177, %v124
  %206 = vst.msk [vmem:[#allocation2 + $0xe0] sm:$0xff] %vm177, %v125
  %207 = vst.msk [vmem:[#allocation2 + $0xe8] sm:$0xff] %vm177, %v126
  %208 = vst.msk [vmem:[#allocation2 + $0xf0] sm:$0xff] %vm177, %v127
  %209 = vst.msk [vmem:[#allocation2 + $0xf8] sm:$0xff] %vm177, %v128
  %210 = vst.msk [vmem:[#allocation2 + $0x100] sm:$0xff] %vm177, %v129
  %211 = vst.msk [vmem:[#allocation2 + $0x108] sm:$0xff] %vm177, %v130
  %212 = vst.msk [vmem:[#allocation2 + $0x110] sm:$0xff] %vm177, %v131
  %213 = vst.msk [vmem:[#allocation2 + $0x118] sm:$0xff] %vm177, %v132
  %214 = vst.msk [vmem:[#allocation2 + $0x120] sm:$0xff] %vm177, %v133
  %215 = vst.msk [vmem:[#allocation2 + $0x128] sm:$0xff] %vm177, %v134
  %216 = vst.msk [vmem:[#allocation2 + $0x130] sm:$0xff] %vm177, %v135
  %217 = vst.msk [vmem:[#allocation2 + $0x138] sm:$0xff] %vm177, %v136
  %218 = vst.msk [vmem:[#allocation2 + $0x140] sm:$0xff] %vm177, %v137
  %219 = vst.msk [vmem:[#allocation2 + $0x148] sm:$0xff] %vm177, %v138
  %220 = vst.msk [vmem:[#allocation2 + $0x150] sm:$0xff] %vm177, %v139
  %221 = vst.msk [vmem:[#allocation2 + $0x158] sm:$0xff] %vm177, %v140
  %222 = vst.msk [vmem:[#allocation2 + $0x160] sm:$0xff] %vm177, %v141
  %223 = vst.msk [vmem:[#allocation2 + $0x168] sm:$0xff] %vm177, %v142
  %224 = vst.msk [vmem:[#allocation2 + $0x170] sm:$0xff] %vm177, %v143
  %225 = vst.msk [vmem:[#allocation2 + $0x178] sm:$0xff] %vm177, %v144
  %226 = vst.msk [vmem:[#allocation2 + $0x180] sm:$0xff] %vm177, %v145
  %227 = vst.msk [vmem:[#allocation2 + $0x188] sm:$0xff] %vm177, %v146
  %228 = vst.msk [vmem:[#allocation2 + $0x190] sm:$0xff] %vm177, %v147
  %229 = vst.msk [vmem:[#allocation2 + $0x198] sm:$0xff] %vm177, %v148
  %230 = vst.msk [vmem:[#allocation2 + $0x1a0] sm:$0xff] %vm177, %v149
  %231 = vst.msk [vmem:[#allocation2 + $0x1a8] sm:$0xff] %vm177, %v150
  %232 = vst.msk [vmem:[#allocation2 + $0x1b0] sm:$0xff] %vm177, %v151
  %233 = vst.msk [vmem:[#allocation2 + $0x1b8] sm:$0xff] %vm177, %v152
  %234 = vst.msk [vmem:[#allocation2 + $0x1c0] sm:$0xff] %vm177, %v153
  %235 = vst.msk [vmem:[#allocation2 + $0x1c8] sm:$0xff] %vm177, %v154
  %236 = vst.msk [vmem:[#allocation2 + $0x1d0] sm:$0xff] %vm177, %v155
  %237 = vst.msk [vmem:[#allocation2 + $0x1d8] sm:$0xff] %vm177, %v156
  %238 = vst.msk [vmem:[#allocation2 + $0x1e0] sm:$0xff] %vm177, %v157
  %239 = vst.msk [vmem:[#allocation2 + $0x1e8] sm:$0xff] %vm177, %v158
  %240 = vst.msk [vmem:[#allocation2 + $0x1f0] sm:$0xff] %vm177, %v159
  %241 = vst.msk [vmem:[#allocation2 + $0x1f8] sm:$0xff] %vm177, %v160
  %242 = vst.msk [vmem:[#allocation2 + $0x200] sm:$0xff] %vm177, %v161
  %243 = vst.msk [vmem:[#allocation2 + $0x208] sm:$0xff] %vm177, %v162
  %244 = vst.msk [vmem:[#allocation2 + $0x210] sm:$0xff] %vm177, %v163
  %245 = vst.msk [vmem:[#allocation2 + $0x218] sm:$0xff] %vm177, %v164
  %246 = vst.msk [vmem:[#allocation2 + $0x220] sm:$0xff] %vm177, %v165
  %247 = vst.msk [vmem:[#allocation2 + $0x228] sm:$0xff] %vm177, %v166
  %248 = vst.msk [vmem:[#allocation2 + $0x230] sm:$0xff] %vm177, %v167
  %249 = vst.msk [vmem:[#allocation2 + $0x238] sm:$0xff] %vm177, %v168
  %250 = vst.msk [vmem:[#allocation2 + $0x240] sm:$0xff] %vm177, %v169
  %251 = vst.msk [vmem:[#allocation2 + $0x248] sm:$0xff] %vm177, %v170
  %252 = vst.msk [vmem:[#allocation2 + $0x250] sm:$0xff] %vm177, %v171
  %253 = vst.msk [vmem:[#allocation2 + $0x258] sm:$0xff] %vm177, %v172
  %254 = vst.msk [vmem:[#allocation2 + $0x260] sm:$0xff] %vm177, %v173
  %255 = vst.msk [vmem:[#allocation2 + $0x268] sm:$0xff] %vm177, %v174
  %256 = vst.msk [vmem:[#allocation2 + $0x270] sm:$0xff] %vm177, %v175
  %257 = vst.msk [vmem:[#allocation2 + $0x278] sm:$0xff] %vm177, %v176
  %v258 = vld [vmem:[#allocation2] sm:$0xff]
  %v259 = vld [vmem:[#allocation2 + $0x8] sm:$0xff]
  %v260 = vld [vmem:[#allocation2 + $0x10] sm:$0xff]
  %v261 = vld [vmem:[#allocation2 + $0x18] sm:$0xff]
  %v262 = vld [vmem:[#allocation2 + $0x20] sm:$0xff]
  %v263 = vld [vmem:[#allocation2 + $0x28] sm:$0xff]
  %v264 = vld [vmem:[#allocation2 + $0x30] sm:$0xff]
  %v265 = vld [vmem:[#allocation2 + $0x38] sm:$0xff]
  %v266 = vld [vmem:[#allocation2 + $0x40] sm:$0xff]
  %v267 = vld [vmem:[#allocation2 + $0x48] sm:$0xff]
  %v268 = vld [vmem:[#allocation2 + $0x50] sm:$0xff]
  %v269 = vld [vmem:[#allocation2 + $0x58] sm:$0xff]
  %v270 = vld [vmem:[#allocation2 + $0x60] sm:$0xff]
  %v271 = vld [vmem:[#allocation2 + $0x68] sm:$0xff]
  %v272 = vld [vmem:[#allocation2 + $0x70] sm:$0xff]
  %v273 = vld [vmem:[#allocation2 + $0x78] sm:$0xff]
  %v274 = vld [vmem:[#allocation2 + $0x80] sm:$0xff]
  %v275 = vld [vmem:[#allocation2 + $0x88] sm:$0xff]
  %v276 = vld [vmem:[#allocation2 + $0x90] sm:$0xff]
  %v277 = vld [vmem:[#allocation2 + $0x98] sm:$0xff]
  %v278 = vld [vmem:[#allocation2 + $0xa0] sm:$0xff]
  %v279 = vld [vmem:[#allocation2 + $0xa8] sm:$0xff]
  %v280 = vld [vmem:[#allocation2 + $0xb0] sm:$0xff]
  %v281 = vld [vmem:[#allocation2 + $0xb8] sm:$0xff]
  %v282 = vld [vmem:[#allocation2 + $0xc0] sm:$0xff]
  %v283 = vld [vmem:[#allocation2 + $0xc8] sm:$0xff]
  %v284 = vld [vmem:[#allocation2 + $0xd0] sm:$0xff]
  %v285 = vld [vmem:[#allocation2 + $0xd8] sm:$0xff]
  %v286 = vld [vmem:[#allocation2 + $0xe0] sm:$0xff]
  %v287 = vld [vmem:[#allocation2 + $0xe8] sm:$0xff]
  %v288 = vld [vmem:[#allocation2 + $0xf0] sm:$0xff]
  %v289 = vld [vmem:[#allocation2 + $0xf8] sm:$0xff]
  %v290 = vld [vmem:[#allocation2 + $0x100] sm:$0xff]
  %v291 = vld [vmem:[#allocation2 + $0x108] sm:$0xff]
  %v292 = vld [vmem:[#allocation2 + $0x110] sm:$0xff]
  %v293 = vld [vmem:[#allocation2 + $0x118] sm:$0xff]
  %v294 = vld [vmem:[#allocation2 + $0x120] sm:$0xff]
  %v295 = vld [vmem:[#allocation2 + $0x128] sm:$0xff]
  %v296 = vld [vmem:[#allocation2 + $0x130] sm:$0xff]
  %v297 = vld [vmem:[#allocation2 + $0x138] sm:$0xff]
  %v298 = vld [vmem:[#allocation2 + $0x140] sm:$0xff]
  %v299 = vld [vmem:[#allocation2 + $0x148] sm:$0xff]
  %v300 = vld [vmem:[#allocation2 + $0x150] sm:$0xff]
  %v301 = vld [vmem:[#allocation2 + $0x158] sm:$0xff]
  %v302 = vld [vmem:[#allocation2 + $0x160] sm:$0xff]
  %v303 = vld [vmem:[#allocation2 + $0x168] sm:$0xff]
  %v304 = vld [vmem:[#allocation2 + $0x170] sm:$0xff]
  %v305 = vld [vmem:[#allocation2 + $0x178] sm:$0xff]
  %v306 = vld [vmem:[#allocation2 + $0x180] sm:$0xff]
  %v307 = vld [vmem:[#allocation2 + $0x188] sm:$0xff]
  %v308 = vld [vmem:[#allocation2 + $0x190] sm:$0xff]
  %v309 = vld [vmem:[#allocation2 + $0x198] sm:$0xff]
  %v310 = vld [vmem:[#allocation2 + $0x1a0] sm:$0xff]
  %v311 = vld [vmem:[#allocation2 + $0x1a8] sm:$0xff]
  %v312 = vld [vmem:[#allocation2 + $0x1b0] sm:$0xff]
  %v313 = vld [vmem:[#allocation2 + $0x1b8] sm:$0xff]
  %v314 = vld [vmem:[#allocation2 + $0x1c0] sm:$0xff]
  %v315 = vld [vmem:[#allocation2 + $0x1c8] sm:$0xff]
  %v316 = vld [vmem:[#allocation2 + $0x1d0] sm:$0xff]
  %v317 = vld [vmem:[#allocation2 + $0x1d8] sm:$0xff]
  %v318 = vld [vmem:[#allocation2 + $0x1e0] sm:$0xff]
  %v319 = vld [vmem:[#allocation2 + $0x1e8] sm:$0xff]
  %v320 = vld [vmem:[#allocation2 + $0x1f0] sm:$0xff]
  %v321 = vld [vmem:[#allocation2 + $0x1f8] sm:$0xff]
  %v322 = vld [vmem:[#allocation2 + $0x200] sm:$0xff]
  %v323 = vld [vmem:[#allocation2 + $0x208] sm:$0xff]
  %v324 = vld [vmem:[#allocation2 + $0x210] sm:$0xff]
  %v325 = vld [vmem:[#allocation2 + $0x218] sm:$0xff]
  %v326 = vld [vmem:[#allocation2 + $0x220] sm:$0xff]
  %v327 = vld [vmem:[#allocation2 + $0x228] sm:$0xff]
  %v328 = vld [vmem:[#allocation2 + $0x230] sm:$0xff]
  %v329 = vld [vmem:[#allocation2 + $0x238] sm:$0xff]
  %v330 = vld [vmem:[#allocation2 + $0x240] sm:$0xff]
  %v331 = vld [vmem:[#allocation2 + $0x248] sm:$0xff]
  %v332 = vld [vmem:[#allocation2 + $0x250] sm:$0xff]
  %v333 = vld [vmem:[#allocation2 + $0x258] sm:$0xff]
  %v334 = vld [vmem:[#allocation2 + $0x260] sm:$0xff]
  %v335 = vld [vmem:[#allocation2 + $0x268] sm:$0xff]
  %v336 = vld [vmem:[#allocation2 + $0x270] sm:$0xff]
  %v337 = vld [vmem:[#allocation2 + $0x278] sm:$0xff]
  %338 = vxpose.xlu0.b32.start [1/16] %v258, 128
  %339 = vxpose.xlu0.b32.cont [2/16] %v259, 128
  %340 = vxpose.xlu0.b32.cont [3/16] %v260, 128
  %341 = vxpose.xlu0.b32.cont [4/16] %v261, 128
  %342 = vxpose.xlu0.b32.cont [5/16] %v262, 128
  %343 = vxpose.xlu0.b32.cont [6/16] %v263, 128
  %344 = vxpose.xlu0.b32.cont [7/16] %v264, 128
  %345 = vxpose.xlu0.b32.cont [8/16] %v265, 128
  %346 = vxpose.xlu0.b32.cont [9/16] %v266, 128
  %347 = vxpose.xlu0.b32.cont [10/16] %v267, 128
  %348 = vxpose.xlu0.b32.cont [11/16] %v268, 128
  %349 = vxpose.xlu0.b32.cont [12/16] %v269, 128
  %350 = vxpose.xlu0.b32.cont [13/16] %v270, 128
  %351 = vxpose.xlu0.b32.cont [14/16] %v271, 128
  %352 = vxpose.xlu0.b32.cont [15/16] %v272, 128
  %353 = vxpose.xlu0.b32.end [16/16] %v273, 128
  %v354 = vpop.trf.xlu0
  %v355 = vpop.trf.xlu0
  %v356 = vpop.trf.xlu0
  %v357 = vpop.trf.xlu0
  %v358 = vpop.trf.xlu0
  %v359 = vpop.trf.xlu0
  %v360 = vpop.trf.xlu0
  %v361 = vpop.trf.xlu0
  %v362 = vpop.trf.xlu0
  %v363 = vpop.trf.xlu0
  %v364 = vpop.trf.xlu0
  %v365 = vpop.trf.xlu0
  %v366 = vpop.trf.xlu0
  %v367 = vpop.trf.xlu0
  %v368 = vpop.trf.xlu0
  %v369 = vpop.trf.xlu0
  %370 = vxpose.xlu0.b32.start [1/16] %v274, 128
  %371 = vxpose.xlu0.b32.cont [2/16] %v275, 128
  %372 = vxpose.xlu0.b32.cont [3/16] %v276, 128
  %373 = vxpose.xlu0.b32.cont [4/16] %v277, 128
  %374 = vxpose.xlu0.b32.cont [5/16] %v278, 128
  %375 = vxpose.xlu0.b32.cont [6/16] %v279, 128
  %376 = vxpose.xlu0.b32.cont [7/16] %v280, 128
  %377 = vxpose.xlu0.b32.cont [8/16] %v281, 128
  %378 = vxpose.xlu0.b32.cont [9/16] %v282, 128
  %379 = vxpose.xlu0.b32.cont [10/16] %v283, 128
  %380 = vxpose.xlu0.b32.cont [11/16] %v284, 128
  %381 = vxpose.xlu0.b32.cont [12/16] %v285, 128
  %382 = vxpose.xlu0.b32.cont [13/16] %v286, 128
  %383 = vxpose.xlu0.b32.cont [14/16] %v287, 128
  %384 = vxpose.xlu0.b32.cont [15/16] %v288, 128
  %385 = vxpose.xlu0.b32.end [16/16] %v289, 128
  %v386 = vpop.trf.xlu0
  %v387 = vpop.trf.xlu0
  %v388 = vpop.trf.xlu0
  %v389 = vpop.trf.xlu0
  %v390 = vpop.trf.xlu0
  %v391 = vpop.trf.xlu0
  %v392 = vpop.trf.xlu0
  %v393 = vpop.trf.xlu0
  %v394 = vpop.trf.xlu0
  %v395 = vpop.trf.xlu0
  %v396 = vpop.trf.xlu0
  %v397 = vpop.trf.xlu0
  %v398 = vpop.trf.xlu0
  %v399 = vpop.trf.xlu0
  %v400 = vpop.trf.xlu0
  %v401 = vpop.trf.xlu0
  %402 = vxpose.xlu0.b32.start [1/16] %v290, 128
  %403 = vxpose.xlu0.b32.cont [2/16] %v291, 128
  %404 = vxpose.xlu0.b32.cont [3/16] %v292, 128
  %405 = vxpose.xlu0.b32.cont [4/16] %v293, 128
  %406 = vxpose.xlu0.b32.cont [5/16] %v294, 128
  %407 = vxpose.xlu0.b32.cont [6/16] %v295, 128
  %408 = vxpose.xlu0.b32.cont [7/16] %v296, 128
  %409 = vxpose.xlu0.b32.cont [8/16] %v297, 128
  %410 = vxpose.xlu0.b32.cont [9/16] %v298, 128
  %411 = vxpose.xlu0.b32.cont [10/16] %v299, 128
  %412 = vxpose.xlu0.b32.cont [11/16] %v300, 128
  %413 = vxpose.xlu0.b32.cont [12/16] %v301, 128
  %414 = vxpose.xlu0.b32.cont [13/16] %v302, 128
  %415 = vxpose.xlu0.b32.cont [14/16] %v303, 128
  %416 = vxpose.xlu0.b32.cont [15/16] %v304, 128
  %417 = vxpose.xlu0.b32.end [16/16] %v305, 128
  %v418 = vpop.trf.xlu0
  %v419 = vpop.trf.xlu0
  %v420 = vpop.trf.xlu0
  %v421 = vpop.trf.xlu0
  %v422 = vpop.trf.xlu0
  %v423 = vpop.trf.xlu0
  %v424 = vpop.trf.xlu0
  %v425 = vpop.trf.xlu0
  %v426 = vpop.trf.xlu0
  %v427 = vpop.trf.xlu0
  %v428 = vpop.trf.xlu0
  %v429 = vpop.trf.xlu0
  %v430 = vpop.trf.xlu0
  %v431 = vpop.trf.xlu0
  %v432 = vpop.trf.xlu0
  %v433 = vpop.trf.xlu0
  %434 = vxpose.xlu0.b32.start [1/16] %v306, 128
  %435 = vxpose.xlu0.b32.cont [2/16] %v307, 128
  %436 = vxpose.xlu0.b32.cont [3/16] %v308, 128
  %437 = vxpose.xlu0.b32.cont [4/16] %v309, 128
  %438 = vxpose.xlu0.b32.cont [5/16] %v310, 128
  %439 = vxpose.xlu0.b32.cont [6/16] %v311, 128
  %440 = vxpose.xlu0.b32.cont [7/16] %v312, 128
  %441 = vxpose.xlu0.b32.cont [8/16] %v313, 128
  %442 = vxpose.xlu0.b32.cont [9/16] %v314, 128
  %443 = vxpose.xlu0.b32.cont [10/16] %v315, 128
  %444 = vxpose.xlu0.b32.cont [11/16] %v316, 128
  %445 = vxpose.xlu0.b32.cont [12/16] %v317, 128
  %446 = vxpose.xlu0.b32.cont [13/16] %v318, 128
  %447 = vxpose.xlu0.b32.cont [14/16] %v319, 128
  %448 = vxpose.xlu0.b32.cont [15/16] %v320, 128
  %449 = vxpose.xlu0.b32.end [16/16] %v321, 128
  %v450 = vpop.trf.xlu0
  %v451 = vpop.trf.xlu0
  %v452 = vpop.trf.xlu0
  %v453 = vpop.trf.xlu0
  %v454 = vpop.trf.xlu0
  %v455 = vpop.trf.xlu0
  %v456 = vpop.trf.xlu0
  %v457 = vpop.trf.xlu0
  %v458 = vpop.trf.xlu0
  %v459 = vpop.trf.xlu0
  %v460 = vpop.trf.xlu0
  %v461 = vpop.trf.xlu0
  %v462 = vpop.trf.xlu0
  %v463 = vpop.trf.xlu0
  %v464 = vpop.trf.xlu0
  %v465 = vpop.trf.xlu0
  %466 = vxpose.xlu0.b32.start [1/16] %v322, 128
  %467 = vxpose.xlu0.b32.cont [2/16] %v323, 128
  %468 = vxpose.xlu0.b32.cont [3/16] %v324, 128
  %469 = vxpose.xlu0.b32.cont [4/16] %v325, 128
  %470 = vxpose.xlu0.b32.cont [5/16] %v326, 128
  %471 = vxpose.xlu0.b32.cont [6/16] %v327, 128
  %472 = vxpose.xlu0.b32.cont [7/16] %v328, 128
  %473 = vxpose.xlu0.b32.cont [8/16] %v329, 128
  %474 = vxpose.xlu0.b32.cont [9/16] %v330, 128
  %475 = vxpose.xlu0.b32.cont [10/16] %v331, 128
  %476 = vxpose.xlu0.b32.cont [11/16] %v332, 128
  %477 = vxpose.xlu0.b32.cont [12/16] %v333, 128
  %478 = vxpose.xlu0.b32.cont [13/16] %v334, 128
  %479 = vxpose.xlu0.b32.cont [14/16] %v335, 128
  %480 = vxpose.xlu0.b32.cont [15/16] %v336, 128
  %481 = vxpose.xlu0.b32.end [16/16] %v337, 128
  %v482 = vpop.trf.xlu0
  %v483 = vpop.trf.xlu0
  %v484 = vpop.trf.xlu0
  %v485 = vpop.trf.xlu0
  %v486 = vpop.trf.xlu0
  %v487 = vpop.trf.xlu0
  %v488 = vpop.trf.xlu0
  %v489 = vpop.trf.xlu0
  %v490 = vpop.trf.xlu0
  %v491 = vpop.trf.xlu0
  %v492 = vpop.trf.xlu0
  %v493 = vpop.trf.xlu0
  %v494 = vpop.trf.xlu0
  %v495 = vpop.trf.xlu0
  %v496 = vpop.trf.xlu0
  %v497 = vpop.trf.xlu0
  %v502 = vcombine.low %v354, %v386
  %v503 = vcombine.low %v418, %v450
  %506 = vst [vmem:[%s3] sm:$0x77] %v502
  %507 = vst [vmem:[%s3 + $0x8] sm:$0x77] %v503
  %508 = vst [vmem:[%s3 + $0x10] sm:$0x7] %v482
  // Predicated region
  $region10: #{model_forward.1} parent=0 // pred_check
    _
  $region11: #{model_forward.1} parent=0 // pred_check_branch
    %510 = sbr.rel (0) target = $region13
  $region12: #{model_forward.1} parent=0 // pred_region
    _
  $region13: #{model_forward.1} parent=0 // pred_fallthru
    _
  // Predicated region
  $region14: #{model_forward.1} parent=0 // pred_check
    _
  $region15: #{model_forward.1} parent=0 // pred_check_branch
    %512 = sbr.rel (0) target = $region17
  $region16: #{model_forward.1} parent=0 // pred_region
    _
  $region17: #{model_forward.1} parent=0 // pred_fallthru
    _
  // Predicated region
  $region18: #{model_forward.1} parent=0 // pred_check
    _
  $region19: #{model_forward.1} parent=0 // pred_check_branch
    %514 = sbr.rel (0) target = $region21
  $region20: #{model_forward.1} parent=0 // pred_region
    _
  $region21: #{model_forward.1} parent=0 // pred_fallthru
    _
  // Predicated region
  $region22: #{model_forward.1} parent=0 // pred_check
    _
  $region23: #{model_forward.1} parent=0 // pred_check_branch
    %516 = sbr.rel (0) target = $region25
  $region24: #{model_forward.1} parent=0 // pred_region
    _
  $region25: #{model_forward.1} parent=0 // pred_fallthru
    _

</llo_original>
